<compile_context>
chip_gen: v6e
topology: v6e:2x2x1
jax: 0.10.0
libtpu: 0.0.40
codegen_flags: <defaults>
</compile_context>

<pallas_src>
import functools

import jax
import jax.numpy as jnp
from jax.experimental import pallas as pl
from jax.experimental.pallas import tpu as pltpu

LANE = 128


def _round_up(x, m):
    return ((x + m - 1) // m) * m


# ----------------------------------------------------------------------------
# Fused multi-layer GRU cell kernel (single timestep).
# refs layout:
#   x_ref   : (B, Dp0)  f32      layer-0 input, zero-padded to Dp0 lanes
#   h_ref   : (L, B, Hp) f32     previous hidden states (zero-padded lanes)
#   per layer l (2 refs each):
#     W     : (Dp_l + Hp, 4*Hp) bf16   block-stacked [x|h] x [r|z|n_i|n_h]
#     b     : (1, 4*Hp) f32            [b_ir+b_hr | b_iz+b_hz | b_in | b_hn]
#   hout_ref: (L, B, Hp) f32     new hidden states (aliases h_ref's HBM buffer)
# ----------------------------------------------------------------------------
def _make_fused_gru_kernel(num_layer, hp):
    def kernel(*refs):
        x_ref, h_ref = refs[0], refs[1]
        hout_ref = refs[-1]

        x = x_ref[...]                                       # (B, Dp0) f32
        for l in range(num_layer):
            w_ref = refs[2 + 2 * l]                          # (Dp_l+Hp, 4Hp) bf16
            b_ref = refs[3 + 2 * l]                          # (1, 4Hp) f32
            h = h_ref[l]                                     # (B, Hp) f32

            # One fused MXU matmul per layer on u = [x | h]; f32 accumulation.
            u = jnp.concatenate(
                [x.astype(jnp.bfloat16), h.astype(jnp.bfloat16)], axis=-1)
            s = jnp.dot(u, w_ref[...],
                        preferred_element_type=jnp.float32) + b_ref[...]

            # Gate blocks are Hp (multiple of 128) lanes wide -> aligned slices.
            # Epilogue stays in f32 (v5e has no bf16 VPU/EUP).
            rz = jax.nn.sigmoid(s[:, 0:2 * hp])
            r = rz[:, 0:hp]
            z = rz[:, hp:2 * hp]
            n = jnp.tanh(s[:, 2 * hp:3 * hp] + r * s[:, 3 * hp:4 * hp])

            h_new = n + z * (h - n)                          # == (1-z)*n + z*h
            hout_ref[l] = h_new                              # lane-dense store
            x = h_new                                        # feeds next layer
        # TODO(synk): nn.GRU inter-layer dropout only applies when dropout > 0
        # (default 0), so it is intentionally omitted.
    return kernel


def fused_gru_forward(kparams, x_pad, hidden_pad, hp):
    """x_pad: (B, Dp0) f32, hidden_pad: (L, B, Hp) f32 -> new hidden (L, B, Hp)."""
    num_layer = len(kparams)
    _, B, _ = hidden_pad.shape
    vmem = pl.BlockSpec(memory_space=pltpu.MemorySpace.VMEM)

    operands = [x_pad, hidden_pad]
    for p in kparams:
        operands += [p["W"], p["b"]]

    # TODO(synk): if hidden_size / num_layer ever scale up (e.g. H=1024, L>=4,
    # ~50 MiB bf16 weights), do NOT keep all layers resident: add a per-layer
    # grid axis ("arbitrary") with weight BlockSpecs so only ~2 layers are
    # double-buffered (v7x has 64 MiB VMEM / 32 MiB default scoped), and a
    # "parallel" batch grid axis for v7x's two TensorCores if B grows.
    return pl.pallas_call(
        _make_fused_gru_kernel(num_layer, hp),
        out_shape=jax.ShapeDtypeStruct((num_layer, B, hp), jnp.float32),
        in_specs=[vmem] * len(operands),
        out_specs=vmem,
        input_output_aliases={1: 0},   # hidden buffer reused for the output
    )(*operands)


# ----------------------------------------------------------------------------
# Parameter construction (deterministic, PyTorch nn.GRU shapes):
#   layer k: weight_ih (3H, D_in_k), weight_hh (3H, H), bias_ih (3H,), bias_hh (3H,)
# ----------------------------------------------------------------------------
def init_gru_params(key, input_size, hidden_size, num_layer):
    params = []
    bound = 1.0 / float(hidden_size) ** 0.5
    for layer in range(num_layer):
        d_in = input_size if layer == 0 else hidden_size
        key, k1, k2, k3, k4 = jax.random.split(key, 5)
        params.append(dict(
            w_ih=jax.random.uniform(k1, (3 * hidden_size, d_in), jnp.float32, -bound, bound),
            w_hh=jax.random.uniform(k2, (3 * hidden_size, hidden_size), jnp.float32, -bound, bound),
            b_ih=jax.random.uniform(k3, (3 * hidden_size,), jnp.float32, -bound, bound),
            b_hh=jax.random.uniform(k4, (3 * hidden_size,), jnp.float32, -bound, bound),
        ))
    return params


def prepare_kernel_params(params, input_size, hidden_size):
    """One-time packing (hoisted out of the forward path).

    Per layer: W_big (Dp_l + Hp, 4*Hp) bf16 with lane-aligned gate column
    blocks [r | z | n_i | n_h] (zero rows/cols for padding and to keep the
    gi_n / gh_n blocks separate), and b_big (1, 4*Hp) f32 with r/z biases
    pre-summed and b_in / b_hn kept separate.
    """
    H = hidden_size
    hp = max(_round_up(H, LANE), LANE)
    dp0 = max(_round_up(input_size, LANE), LANE)

    kparams = []
    for layer, p in enumerate(params):
        d_in = input_size if layer == 0 else H
        dp = dp0 if layer == 0 else hp
        w_ih, w_hh = p["w_ih"], p["w_hh"]          # (3H, d_in), (3H, H)
        b_ih, b_hh = p["b_ih"], p["b_hh"]

        W = jnp.zeros((dp + hp, 4 * hp), jnp.float32)
        # x-part rows [0:d_in): r, z, n_i gate blocks
        W = W.at[0:d_in, 0 * hp:0 * hp + H].set(w_ih[0:H].T)
        W = W.at[0:d_in, 1 * hp:1 * hp + H].set(w_ih[H:2 * H].T)
        W = W.at[0:d_in, 2 * hp:2 * hp + H].set(w_ih[2 * H:3 * H].T)
        # h-part rows [dp:dp+H): r, z, n_h gate blocks
        W = W.at[dp:dp + H, 0 * hp:0 * hp + H].set(w_hh[0:H].T)
        W = W.at[dp:dp + H, 1 * hp:1 * hp + H].set(w_hh[H:2 * H].T)
        W = W.at[dp:dp + H, 3 * hp:3 * hp + H].set(w_hh[2 * H:3 * H].T)

        b = jnp.zeros((1, 4 * hp), jnp.float32)
        b = b.at[0, 0 * hp:0 * hp + H].set(b_ih[0:H] + b_hh[0:H])
        b = b.at[0, 1 * hp:1 * hp + H].set(b_ih[H:2 * H] + b_hh[H:2 * H])
        b = b.at[0, 2 * hp:2 * hp + H].set(b_ih[2 * H:3 * H])
        b = b.at[0, 3 * hp:3 * hp + H].set(b_hh[2 * H:3 * H])

        kparams.append(dict(W=W.astype(jnp.bfloat16), b=b))
    return kparams, hp, dp0


# ----------------------------------------------------------------------------
# BaselineGRUEncoder.forward equivalent (jitted end-to-end):
#   embedded_input -> view(1, batch, input_size) -> nn.GRU(seq=1, num_layer)
#   returns (output, hidden) with shapes (1, B, H) and (num_layer, B, H)
# ----------------------------------------------------------------------------
def make_encoder_forward(input_size, hidden_size, num_layer, hp, dp0):
    @jax.jit
    def forward(kparams, embedded_input, hidden):
        B = hidden.shape[1]
        x = embedded_input.reshape(1, B, input_size)[0]              # (B, D)
        x_pad = jnp.pad(x, ((0, 0), (0, dp0 - input_size)))          # (B, Dp0)
        h_pad = jnp.pad(hidden, ((0, 0), (0, 0), (0, hp - hidden_size)))
        h_out_pad = fused_gru_forward(kparams, x_pad, h_pad, hp)     # (L, B, Hp)
        hidden_out = h_out_pad[:, :, :hidden_size]                   # (L, B, H)
        output = hidden_out[num_layer - 1][None]                     # (1, B, H)
        return output, hidden_out
    return forward


# ----------------------------------------------------------------------------
# Pure-JAX PyTorch-layout reference; mirrors the kernel's bf16 rounding of
# matmul inputs (weights AND activations) with f32 accumulation.
# ----------------------------------------------------------------------------
def _reference_forward(params, x, hidden, hidden_size):
    H = hidden_size

    def bf16(a):
        return a.astype(jnp.bfloat16).astype(jnp.float32)

    layer_in = x
    new_h = []
    for l, p in enumerate(params):
        h = hidden[l]
        gi = bf16(layer_in) @ bf16(p["w_ih"]).T + p["b_ih"]
        gh = bf16(h) @ bf16(p["w_hh"]).T + p["b_hh"]
        r = jax.nn.sigmoid(gi[:, 0:H] + gh[:, 0:H])
        z = jax.nn.sigmoid(gi[:, H:2 * H] + gh[:, H:2 * H])
        n = jnp.tanh(gi[:, 2 * H:3 * H] + r * gh[:, 2 * H:3 * H])
        h_new = (1.0 - z) * n + z * h
        new_h.append(h_new)
        layer_in = h_new
    hidden_out = jnp.stack(new_h, axis=0)
    return hidden_out[-1][None], hidden_out


if __name__ == "__main__":
    batch_size = 2
    input_size = 32
    hidden_size = 32
    num_layer = 2

    key = jax.random.PRNGKey(0)
    key, k_in = jax.random.split(key)

    params = init_gru_params(key, input_size, hidden_size, num_layer)
    kparams, hp, dp0 = prepare_kernel_params(params, input_size, hidden_size)
    kparams = jax.device_put(kparams)

    forward = make_encoder_forward(input_size, hidden_size, num_layer, hp, dp0)

    # embedded_input: anything reshapeable to (1, batch, input_size)
    embedded_input = jax.random.normal(k_in, (batch_size, input_size), jnp.float32)
    # initial_hidden() in the module gives zeros; use zeros for the full stack here.
    hidden0 = jnp.zeros((num_layer, batch_size, hidden_size), jnp.float32)

    output, hidden = forward(kparams, embedded_input, hidden0)
    jax.block_until_ready((output, hidden))

    assert output.shape == (1, batch_size, hidden_size)
    assert hidden.shape == (num_layer, batch_size, hidden_size)

    ref_out, ref_hidden = _reference_forward(
        params, embedded_input.reshape(batch_size, input_size), hidden0, hidden_size)
    assert jnp.allclose(output, ref_out, atol=1e-3, rtol=1e-3), \
        float(jnp.max(jnp.abs(output - ref_out)))
    assert jnp.allclose(hidden, ref_hidden, atol=1e-3, rtol=1e-3), \
        float(jnp.max(jnp.abs(hidden - ref_hidden)))

    print("KERNEL_OK")
</pallas_src>

<mosaic_0001>
module attributes {stable_mosaic.version = 11 : i64} {
  func.func @kernel(%arg0: memref<2x128xf32, #tpu.memory_space<vmem>>, %arg1: memref<2x2x128xf32, #tpu.memory_space<vmem>>, %arg2: memref<256x512xbf16, #tpu.memory_space<vmem>>, %arg3: memref<1x512xf32, #tpu.memory_space<vmem>>, %arg4: memref<256x512xbf16, #tpu.memory_space<vmem>>, %arg5: memref<1x512xf32, #tpu.memory_space<vmem>>, %arg6: memref<2x2x128xf32, #tpu.memory_space<vmem>>) attributes {dimension_semantics = [], scalar_prefetch = 0 : i64, scratch_operands = 0 : i64, tpu.core_type = #tpu.core_type<tc>} {
    %c0 = arith.constant 0 : index
    %c0_0 = arith.constant 0 : index
    %0 = vector.load %arg0[%c0, %c0_0] : memref<2x128xf32, #tpu.memory_space<vmem>>, vector<2x128xf32>
    %c0_1 = arith.constant 0 : index
    %c0_2 = arith.constant 0 : index
    %c0_3 = arith.constant 0 : index
    %1 = vector.load %arg1[%c0_1, %c0_2, %c0_3] : memref<2x2x128xf32, #tpu.memory_space<vmem>>, vector<1x2x128xf32>
    %2 = vector.shape_cast %1 : vector<1x2x128xf32> to vector<2x128xf32>
    %3 = arith.truncf %0 : vector<2x128xf32> to vector<2x128xbf16>
    %4 = arith.truncf %2 : vector<2x128xf32> to vector<2x128xbf16>
    %5 = tpu.concatenate %3, %4 in 1 : vector<2x128xbf16>, vector<2x128xbf16> -> vector<2x256xbf16>
    %c0_4 = arith.constant 0 : index
    %c0_5 = arith.constant 0 : index
    %6 = vector.load %arg2[%c0_4, %c0_5] : memref<256x512xbf16, #tpu.memory_space<vmem>>, vector<256x512xbf16>
    %cst = arith.constant dense<0.000000e+00> : vector<2x512xf32>
    %7 = tpu.matmul %5, %6, %cst {dimension_numbers = #tpu.dot_dimension_numbers<[1], [0], [0], [1], [0, 0, 1, 1], [], []>} : vector<2x256xbf16>, vector<256x512xbf16>, vector<2x512xf32> -> vector<2x512xf32>
    %c0_6 = arith.constant 0 : index
    %c0_7 = arith.constant 0 : index
    %8 = vector.load %arg3[%c0_6, %c0_7] : memref<1x512xf32, #tpu.memory_space<vmem>>, vector<1x512xf32>
    %9 = vector.broadcast %8 : vector<1x512xf32> to vector<2x512xf32>
    %10 = arith.addf %7, %9 : vector<2x512xf32>
    %11 = vector.extract_strided_slice %10 {offsets = [0, 0], sizes = [2, 256], strides = [1, 1]} : vector<2x512xf32> to vector<2x256xf32>
    %12 = arith.negf %11 : vector<2x256xf32>
    %13 = math.exp %12 : vector<2x256xf32>
    %cst_8 = arith.constant 1.000000e+00 : f32
    %14 = vector.broadcast %cst_8 : f32 to vector<2x256xf32>
    %15 = arith.addf %14, %13 : vector<2x256xf32>
    %16 = arith.divf %14, %15 : vector<2x256xf32>
    %17 = vector.extract_strided_slice %16 {offsets = [0, 0], sizes = [2, 128], strides = [1, 1]} : vector<2x256xf32> to vector<2x128xf32>
    %18 = vector.extract_strided_slice %16 {offsets = [0, 128], sizes = [2, 128], strides = [1, 1]} : vector<2x256xf32> to vector<2x128xf32>
    %19 = vector.extract_strided_slice %10 {offsets = [0, 256], sizes = [2, 128], strides = [1, 1]} : vector<2x512xf32> to vector<2x128xf32>
    %20 = vector.extract_strided_slice %10 {offsets = [0, 384], sizes = [2, 128], strides = [1, 1]} : vector<2x512xf32> to vector<2x128xf32>
    %21 = arith.mulf %17, %20 : vector<2x128xf32>
    %22 = arith.addf %19, %21 : vector<2x128xf32>
    %23 = math.tanh %22 : vector<2x128xf32>
    %24 = arith.subf %2, %23 : vector<2x128xf32>
    %25 = arith.mulf %18, %24 : vector<2x128xf32>
    %26 = arith.addf %23, %25 : vector<2x128xf32>
    %c0_9 = arith.constant 0 : index
    %c0_10 = arith.constant 0 : index
    %c0_11 = arith.constant 0 : index
    %27 = vector.load %arg6[%c0_9, %c0_10, %c0_11] : memref<2x2x128xf32, #tpu.memory_space<vmem>>, vector<1x2x128xf32>
    %28 = vector.shape_cast %27 : vector<1x2x128xf32> to vector<2x128xf32>
    %29 = vector.shape_cast %26 : vector<2x128xf32> to vector<1x2x128xf32>
    tpu.vector_store %arg6[%c0_9, %c0_10, %c0_11], %29 {strides = array<i32>} : memref<2x2x128xf32, #tpu.memory_space<vmem>>, vector<1x2x128xf32>,
    %c1 = arith.constant 1 : index
    %c0_12 = arith.constant 0 : index
    %c0_13 = arith.constant 0 : index
    %30 = vector.load %arg1[%c1, %c0_12, %c0_13] : memref<2x2x128xf32, #tpu.memory_space<vmem>>, vector<1x2x128xf32>
    %31 = vector.shape_cast %30 : vector<1x2x128xf32> to vector<2x128xf32>
    %32 = arith.truncf %26 : vector<2x128xf32> to vector<2x128xbf16>
    %33 = arith.truncf %31 : vector<2x128xf32> to vector<2x128xbf16>
    %34 = tpu.concatenate %32, %33 in 1 : vector<2x128xbf16>, vector<2x128xbf16> -> vector<2x256xbf16>
    %c0_14 = arith.constant 0 : index
    %c0_15 = arith.constant 0 : index
    %35 = vector.load %arg4[%c0_14, %c0_15] : memref<256x512xbf16, #tpu.memory_space<vmem>>, vector<256x512xbf16>
    %cst_16 = arith.constant dense<0.000000e+00> : vector<2x512xf32>
    %36 = tpu.matmul %34, %35, %cst_16 {dimension_numbers = #tpu.dot_dimension_numbers<[1], [0], [0], [1], [0, 0, 1, 1], [], []>} : vector<2x256xbf16>, vector<256x512xbf16>, vector<2x512xf32> -> vector<2x512xf32>
    %c0_17 = arith.constant 0 : index
    %c0_18 = arith.constant 0 : index
    %37 = vector.load %arg5[%c0_17, %c0_18] : memref<1x512xf32, #tpu.memory_space<vmem>>, vector<1x512xf32>
    %38 = vector.broadcast %37 : vector<1x512xf32> to vector<2x512xf32>
    %39 = arith.addf %36, %38 : vector<2x512xf32>
    %40 = vector.extract_strided_slice %39 {offsets = [0, 0], sizes = [2, 256], strides = [1, 1]} : vector<2x512xf32> to vector<2x256xf32>
    %41 = arith.negf %40 : vector<2x256xf32>
    %42 = math.exp %41 : vector<2x256xf32>
    %cst_19 = arith.constant 1.000000e+00 : f32
    %43 = vector.broadcast %cst_19 : f32 to vector<2x256xf32>
    %44 = arith.addf %43, %42 : vector<2x256xf32>
    %45 = arith.divf %43, %44 : vector<2x256xf32>
    %46 = vector.extract_strided_slice %45 {offsets = [0, 0], sizes = [2, 128], strides = [1, 1]} : vector<2x256xf32> to vector<2x128xf32>
    %47 = vector.extract_strided_slice %45 {offsets = [0, 128], sizes = [2, 128], strides = [1, 1]} : vector<2x256xf32> to vector<2x128xf32>
    %48 = vector.extract_strided_slice %39 {offsets = [0, 256], sizes = [2, 128], strides = [1, 1]} : vector<2x512xf32> to vector<2x128xf32>
    %49 = vector.extract_strided_slice %39 {offsets = [0, 384], sizes = [2, 128], strides = [1, 1]} : vector<2x512xf32> to vector<2x128xf32>
    %50 = arith.mulf %46, %49 : vector<2x128xf32>
    %51 = arith.addf %48, %50 : vector<2x128xf32>
    %52 = math.tanh %51 : vector<2x128xf32>
    %53 = arith.subf %31, %52 : vector<2x128xf32>
    %54 = arith.mulf %47, %53 : vector<2x128xf32>
    %55 = arith.addf %52, %54 : vector<2x128xf32>
    %c1_20 = arith.constant 1 : index
    %c0_21 = arith.constant 0 : index
    %c0_22 = arith.constant 0 : index
    %56 = vector.load %arg6[%c1_20, %c0_21, %c0_22] : memref<2x2x128xf32, #tpu.memory_space<vmem>>, vector<1x2x128xf32>
    %57 = vector.shape_cast %56 : vector<1x2x128xf32> to vector<2x128xf32>
    %58 = vector.shape_cast %55 : vector<2x128xf32> to vector<1x2x128xf32>
    tpu.vector_store %arg6[%c1_20, %c0_21, %c0_22], %58 {strides = array<i32>} : memref<2x2x128xf32, #tpu.memory_space<vmem>>, vector<1x2x128xf32>,
    return
  }
}

</mosaic_0001>

<llo_original>
// kernel: forward.1
$region0: #{forward.1}
  #allocation0 [shape = 'u32[]', space=smem, size = 0x4, offset = 0x4, fixed_abs, tag = 'smem constant byte address 0x4 - core index']
  #allocation1 [shape = 'u32[144,128]{1,0:T(1,128)}', space=vmem, size = 0x12000, scoped, tag = 'internal scratch']
  %s0 = inlined_call_operand.vmem [shape: f32[2,128], index: 0, kind: input, shape index: {}]
  %s1 = inlined_call_operand.vmem [shape: f32[2,2,128], index: 1, kind: input, shape index: {}, may-alias: {1,6}]
  %s2 = inlined_call_operand.hbm [shape: bf16[256,512], index: 2, kind: input, shape index: {}]
  %s3 = inlined_call_operand.vmem [shape: f32[1,512], index: 3, kind: input, shape index: {}]
  %s4 = inlined_call_operand.hbm [shape: bf16[256,512], index: 4, kind: input, shape index: {}]
  %s5 = inlined_call_operand.vmem [shape: f32[1,512], index: 5, kind: input, shape index: {}]
  %s6 = inlined_call_operand.vmem [shape: f32[2,2,128], index: 6, kind: output, shape index: {}, may-alias: {1,6}]
  %s7 = sld [smem:[#allocation0]]
  $region42: #{forward.1} parent=0
    _
  %s9 = ssub.s32 1, %s7
  %s10 = scalar_select 0, %s9, %s7
  $region1: #{forward.1} parent=0
    #allocation2 [shape = 'u8[262144]{0}', space=vmem, size = 0x40000, scoped, tag = 'input window, operand 2, single buffered']
    #allocation3 [shape = 's32[1]{0}', space=sflag, size = 0x4, scoped, tag = 'scoped memory for forward.1']
    #allocation4 [shape = 'u8[262144]{0}', space=vmem, size = 0x40000, scoped, tag = 'input window, operand 4, single buffered']
    #allocation5 [shape = 's32[1]{0}', space=sflag, size = 0x4, scoped, tag = 'scoped memory for forward.1']
    %11 = vsyncpa [#allocation3], 0
    %12 = vsyncpa [#allocation5], 0
    // Predicated region
    $region2: #{forward.1} parent=1 // pred_check
      _
    $region3: #{forward.1} parent=1 // pred_check_branch
      %14 = sbr.rel (0) target = $region5
    $region4: #{forward.1} parent=1 // pred_region
      _
    $region5: #{forward.1} parent=1 // pred_fallthru
      _
    // Predicated region
    $region6: #{forward.1} parent=1 // pred_check
      _
    $region7: #{forward.1} parent=1 // pred_check_branch
      %16 = sbr.rel (0) target = $region9
    $region8: #{forward.1} parent=1 // pred_region
      _
    $region9: #{forward.1} parent=1 // pred_fallthru
      _
    // Predicated region
    $region10: #{forward.1} parent=1 // pred_check
      _
    $region11: #{forward.1} parent=1 // pred_check_branch
      %18 = sbr.rel (0) target = $region13
    $region12: #{forward.1} parent=1 // pred_region
      %s20 = ssub.s32 8192, 8192
      %21 = vsyncadd [#allocation3], %s20
      %s22 = sshll.u32 [#allocation2], 4
      %s23 = int_to_ptr.vmem [resolvable:$true] %s22
      %28 = dma.hbm_to_vmem [thread:$0]  %s2, 8192, %s23, [#allocation3], 256, 256, 16
    $region13: #{forward.1} parent=1 // pred_fallthru
      _
    // Predicated region
    $region14: #{forward.1} parent=1 // pred_check
      _
    $region15: #{forward.1} parent=1 // pred_check_branch
      %30 = sbr.rel (0) target = $region17
    $region16: #{forward.1} parent=1 // pred_region
      _
    $region17: #{forward.1} parent=1 // pred_fallthru
      _
    // Predicated region
    $region18: #{forward.1} parent=1 // pred_check
      _
    $region19: #{forward.1} parent=1 // pred_check_branch
      %32 = sbr.rel (0) target = $region21
    $region20: #{forward.1} parent=1 // pred_region
      %s34 = ssub.s32 8192, 8192
      %35 = vsyncadd [#allocation5], %s34
      %s36 = sshll.u32 [#allocation4], 4
      %s37 = int_to_ptr.vmem [resolvable:$true] %s36
      %42 = dma.hbm_to_vmem [thread:$0]  %s4, 8192, %s37, [#allocation5], 256, 256, 16
    $region21: #{forward.1} parent=1 // pred_fallthru
      _
    // Predicated region
    $region22: #{forward.1} parent=1 // pred_check
      _
    $region23: #{forward.1} parent=1 // pred_check_branch
      %44 = sbr.rel (0) target = $region25
    $region24: #{forward.1} parent=1 // pred_region
      _
    $region25: #{forward.1} parent=1 // pred_fallthru
      _
    // Predicated region
    $region26: #{forward.1} parent=1 // pred_check
      _
    $region27: #{forward.1} parent=1 // pred_check_branch
      %46 = sbr.rel (0) target = $region29
    $region28: #{forward.1} parent=1 // pred_region
      %47 = dma.done [#allocation3], 8192
    $region29: #{forward.1} parent=1 // pred_fallthru
      _
    // Predicated region
    $region30: #{forward.1} parent=1 // pred_check
      _
    $region31: #{forward.1} parent=1 // pred_check_branch
      %49 = sbr.rel (0) target = $region33
    $region32: #{forward.1} parent=1 // pred_region
      %50 = dma.done [#allocation5], 8192
    $region33: #{forward.1} parent=1 // pred_fallthru
      _
    %v51 = vld [vmem:[%s0] sm:$0x3]
    %v52 = vld [vmem:[%s1] sm:$0x3]
    %v53 = vpack.c.bf16 %v51, %v51
    %v54 = vpack.c.bf16 %v52, %v52
    %v55 = vld [vmem:[#allocation2] sm:$0xff]
    %v56 = vld [vmem:[#allocation2 + $0x8] sm:$0xff]
    %v57 = vld [vmem:[#allocation2 + $0x10] sm:$0xff]
    %v58 = vld [vmem:[#allocation2 + $0x18] sm:$0xff]
    %v59 = vld [vmem:[#allocation2 + $0x20] sm:$0xff]
    %v60 = vld [vmem:[#allocation2 + $0x28] sm:$0xff]
    %v61 = vld [vmem:[#allocation2 + $0x30] sm:$0xff]
    %v62 = vld [vmem:[#allocation2 + $0x38] sm:$0xff]
    %v63 = vld [vmem:[#allocation2 + $0x40] sm:$0xff]
    %v64 = vld [vmem:[#allocation2 + $0x48] sm:$0xff]
    %v65 = vld [vmem:[#allocation2 + $0x50] sm:$0xff]
    %v66 = vld [vmem:[#allocation2 + $0x58] sm:$0xff]
    %v67 = vld [vmem:[#allocation2 + $0x60] sm:$0xff]
    %v68 = vld [vmem:[#allocation2 + $0x68] sm:$0xff]
    %v69 = vld [vmem:[#allocation2 + $0x70] sm:$0xff]
    %v70 = vld [vmem:[#allocation2 + $0x78] sm:$0xff]
    %v71 = vld [vmem:[#allocation2 + $0x80] sm:$0xff]
    %v72 = vld [vmem:[#allocation2 + $0x88] sm:$0xff]
    %v73 = vld [vmem:[#allocation2 + $0x90] sm:$0xff]
    %v74 = vld [vmem:[#allocation2 + $0x98] sm:$0xff]
    %v75 = vld [vmem:[#allocation2 + $0xa0] sm:$0xff]
    %v76 = vld [vmem:[#allocation2 + $0xa8] sm:$0xff]
    %v77 = vld [vmem:[#allocation2 + $0xb0] sm:$0xff]
    %v78 = vld [vmem:[#allocation2 + $0xb8] sm:$0xff]
    %v79 = vld [vmem:[#allocation2 + $0xc0] sm:$0xff]
    %v80 = vld [vmem:[#allocation2 + $0xc8] sm:$0xff]
    %v81 = vld [vmem:[#allocation2 + $0xd0] sm:$0xff]
    %v82 = vld [vmem:[#allocation2 + $0xd8] sm:$0xff]
    %v83 = vld [vmem:[#allocation2 + $0xe0] sm:$0xff]
    %v84 = vld [vmem:[#allocation2 + $0xe8] sm:$0xff]
    %v85 = vld [vmem:[#allocation2 + $0xf0] sm:$0xff]
    %v86 = vld [vmem:[#allocation2 + $0xf8] sm:$0xff]
    %v87 = vld [vmem:[#allocation2 + $0x100] sm:$0xff]
    %v88 = vld [vmem:[#allocation2 + $0x108] sm:$0xff]
    %v89 = vld [vmem:[#allocation2 + $0x110] sm:$0xff]
    %v90 = vld [vmem:[#allocation2 + $0x118] sm:$0xff]
    %v91 = vld [vmem:[#allocation2 + $0x120] sm:$0xff]
    %v92 = vld [vmem:[#allocation2 + $0x128] sm:$0xff]
    %v93 = vld [vmem:[#allocation2 + $0x130] sm:$0xff]
    %v94 = vld [vmem:[#allocation2 + $0x138] sm:$0xff]
    %v95 = vld [vmem:[#allocation2 + $0x140] sm:$0xff]
    %v96 = vld [vmem:[#allocation2 + $0x148] sm:$0xff]
    %v97 = vld [vmem:[#allocation2 + $0x150] sm:$0xff]
    %v98 = vld [vmem:[#allocation2 + $0x158] sm:$0xff]
    %v99 = vld [vmem:[#allocation2 + $0x160] sm:$0xff]
    %v100 = vld [vmem:[#allocation2 + $0x168] sm:$0xff]
    %v101 = vld [vmem:[#allocation2 + $0x170] sm:$0xff]
    %v102 = vld [vmem:[#allocation2 + $0x178] sm:$0xff]
    %v103 = vld [vmem:[#allocation2 + $0x180] sm:$0xff]
    %v104 = vld [vmem:[#allocation2 + $0x188] sm:$0xff]
    %v105 = vld [vmem:[#allocation2 + $0x190] sm:$0xff]
    %v106 = vld [vmem:[#allocation2 + $0x198] sm:$0xff]
    %v107 = vld [vmem:[#allocation2 + $0x1a0] sm:$0xff]
    %v108 = vld [vmem:[#allocation2 + $0x1a8] sm:$0xff]
    %v109 = vld [vmem:[#allocation2 + $0x1b0] sm:$0xff]
    %v110 = vld [vmem:[#allocation2 + $0x1b8] sm:$0xff]
    %v111 = vld [vmem:[#allocation2 + $0x1c0] sm:$0xff]
    %v112 = vld [vmem:[#allocation2 + $0x1c8] sm:$0xff]
    %v113 = vld [vmem:[#allocation2 + $0x1d0] sm:$0xff]
    %v114 = vld [vmem:[#allocation2 + $0x1d8] sm:$0xff]
    %v115 = vld [vmem:[#allocation2 + $0x1e0] sm:$0xff]
    %v116 = vld [vmem:[#allocation2 + $0x1e8] sm:$0xff]
    %v117 = vld [vmem:[#allocation2 + $0x1f0] sm:$0xff]
    %v118 = vld [vmem:[#allocation2 + $0x1f8] sm:$0xff]
    %v119 = vld [vmem:[%s3] sm:$0xf]
    %v121 = vlaneseq
    %v122 = vshrl.u32 %v121, 7
    %v123 = vsub.s32 0, %v122
    %v124 = vrot.slane %v119, %v123
    %v125 = vlaneseq
    %v126 = vshrl.u32 %v125, 7
    %v127 = vsub.s32 1, %v126
    %v128 = vrot.slane %v119, %v127
    %v129 = vlaneseq
    %v130 = vshrl.u32 %v129, 7
    %v131 = vsub.s32 2, %v130
    %v132 = vrot.slane %v119, %v131
    %v133 = vlaneseq
    %v134 = vshrl.u32 %v133, 7
    %v135 = vsub.s32 3, %v134
    %v136 = vrot.slane %v119, %v135
    %v205 = vunpack.c.l.b16 %v55
    %v206 = vunpack.c.h.b16 %v55
    %v207 = vunpack.c.l.b16 %v56
    %v208 = vunpack.c.h.b16 %v56
    %v209 = vunpack.c.l.b16 %v57
    %v210 = vunpack.c.h.b16 %v57
    %v211 = vunpack.c.l.b16 %v58
    %v212 = vunpack.c.h.b16 %v58
    %v213 = vunpack.c.l.b16 %v59
    %v214 = vunpack.c.h.b16 %v59
    %v215 = vunpack.c.l.b16 %v60
    %v216 = vunpack.c.h.b16 %v60
    %v217 = vunpack.c.l.b16 %v61
    %v218 = vunpack.c.h.b16 %v61
    %v219 = vunpack.c.l.b16 %v62
    %v220 = vunpack.c.h.b16 %v62
    %v221 = vunpack.c.l.b16 %v63
    %v222 = vunpack.c.h.b16 %v63
    %v223 = vunpack.c.l.b16 %v64
    %v224 = vunpack.c.h.b16 %v64
    %v225 = vunpack.c.l.b16 %v65
    %v226 = vunpack.c.h.b16 %v65
    %v227 = vunpack.c.l.b16 %v66
    %v228 = vunpack.c.h.b16 %v66
    %v229 = vunpack.c.l.b16 %v67
    %v230 = vunpack.c.h.b16 %v67
    %v231 = vunpack.c.l.b16 %v68
    %v232 = vunpack.c.h.b16 %v68
    %v233 = vunpack.c.l.b16 %v69
    %v234 = vunpack.c.h.b16 %v69
    %v235 = vunpack.c.l.b16 %v70
    %v236 = vunpack.c.h.b16 %v70
    %v237 = vunpack.c.l.b16 %v71
    %v238 = vunpack.c.h.b16 %v71
    %v239 = vunpack.c.l.b16 %v72
    %v240 = vunpack.c.h.b16 %v72
    %v241 = vunpack.c.l.b16 %v73
    %v242 = vunpack.c.h.b16 %v73
    %v243 = vunpack.c.l.b16 %v74
    %v244 = vunpack.c.h.b16 %v74
    %v245 = vunpack.c.l.b16 %v75
    %v246 = vunpack.c.h.b16 %v75
    %v247 = vunpack.c.l.b16 %v76
    %v248 = vunpack.c.h.b16 %v76
    %v249 = vunpack.c.l.b16 %v77
    %v250 = vunpack.c.h.b16 %v77
    %v251 = vunpack.c.l.b16 %v78
    %v252 = vunpack.c.h.b16 %v78
    %v253 = vunpack.c.l.b16 %v79
    %v254 = vunpack.c.h.b16 %v79
    %v255 = vunpack.c.l.b16 %v80
    %v256 = vunpack.c.h.b16 %v80
    %v257 = vunpack.c.l.b16 %v81
    %v258 = vunpack.c.h.b16 %v81
    %v259 = vunpack.c.l.b16 %v82
    %v260 = vunpack.c.h.b16 %v82
    %v261 = vunpack.c.l.b16 %v83
    %v262 = vunpack.c.h.b16 %v83
    %v263 = vunpack.c.l.b16 %v84
    %v264 = vunpack.c.h.b16 %v84
    %v265 = vunpack.c.l.b16 %v85
    %v266 = vunpack.c.h.b16 %v85
    %v267 = vunpack.c.l.b16 %v86
    %v268 = vunpack.c.h.b16 %v86
    %v269 = vunpack.c.l.b16 %v87
    %v270 = vunpack.c.h.b16 %v87
    %v271 = vunpack.c.l.b16 %v88
    %v272 = vunpack.c.h.b16 %v88
    %v273 = vunpack.c.l.b16 %v89
    %v274 = vunpack.c.h.b16 %v89
    %v275 = vunpack.c.l.b16 %v90
    %v276 = vunpack.c.h.b16 %v90
    %v277 = vunpack.c.l.b16 %v91
    %v278 = vunpack.c.h.b16 %v91
    %v279 = vunpack.c.l.b16 %v92
    %v280 = vunpack.c.h.b16 %v92
    %v281 = vunpack.c.l.b16 %v93
    %v282 = vunpack.c.h.b16 %v93
    %v283 = vunpack.c.l.b16 %v94
    %v284 = vunpack.c.h.b16 %v94
    %v285 = vunpack.c.l.b16 %v95
    %v286 = vunpack.c.h.b16 %v95
    %v287 = vunpack.c.l.b16 %v96
    %v288 = vunpack.c.h.b16 %v96
    %v289 = vunpack.c.l.b16 %v97
    %v290 = vunpack.c.h.b16 %v97
    %v291 = vunpack.c.l.b16 %v98
    %v292 = vunpack.c.h.b16 %v98
    %v293 = vunpack.c.l.b16 %v99
    %v294 = vunpack.c.h.b16 %v99
    %v295 = vunpack.c.l.b16 %v100
    %v296 = vunpack.c.h.b16 %v100
    %v297 = vunpack.c.l.b16 %v101
    %v298 = vunpack.c.h.b16 %v101
    %v299 = vunpack.c.l.b16 %v102
    %v300 = vunpack.c.h.b16 %v102
    %v301 = vunpack.c.l.b16 %v103
    %v302 = vunpack.c.h.b16 %v103
    %v303 = vunpack.c.l.b16 %v104
    %v304 = vunpack.c.h.b16 %v104
    %v305 = vunpack.c.l.b16 %v105
    %v306 = vunpack.c.h.b16 %v105
    %v307 = vunpack.c.l.b16 %v106
    %v308 = vunpack.c.h.b16 %v106
    %v309 = vunpack.c.l.b16 %v107
    %v310 = vunpack.c.h.b16 %v107
    %v311 = vunpack.c.l.b16 %v108
    %v312 = vunpack.c.h.b16 %v108
    %v313 = vunpack.c.l.b16 %v109
    %v314 = vunpack.c.h.b16 %v109
    %v315 = vunpack.c.l.b16 %v110
    %v316 = vunpack.c.h.b16 %v110
    %v317 = vunpack.c.l.b16 %v111
    %v318 = vunpack.c.h.b16 %v111
    %v319 = vunpack.c.l.b16 %v112
    %v320 = vunpack.c.h.b16 %v112
    %v321 = vunpack.c.l.b16 %v113
    %v322 = vunpack.c.h.b16 %v113
    %v323 = vunpack.c.l.b16 %v114
    %v324 = vunpack.c.h.b16 %v114
    %v325 = vunpack.c.l.b16 %v115
    %v326 = vunpack.c.h.b16 %v115
    %v327 = vunpack.c.l.b16 %v116
    %v328 = vunpack.c.h.b16 %v116
    %v329 = vunpack.c.l.b16 %v117
    %v330 = vunpack.c.h.b16 %v117
    %v331 = vunpack.c.l.b16 %v118
    %v332 = vunpack.c.h.b16 %v118
    %v333 = vpack.c.b16 %v209, %v205
    %v334 = vpack.c.b16 %v210, %v206
    %v335 = vpack.c.b16 %v211, %v207
    %v336 = vpack.c.b16 %v212, %v208
    %v337 = vpack.c.b16 %v217, %v213
    %v338 = vpack.c.b16 %v218, %v214
    %v339 = vpack.c.b16 %v219, %v215
    %v340 = vpack.c.b16 %v220, %v216
    %v341 = vpack.c.b16 %v225, %v221
    %v342 = vpack.c.b16 %v226, %v222
    %v343 = vpack.c.b16 %v227, %v223
    %v344 = vpack.c.b16 %v228, %v224
    %v345 = vpack.c.b16 %v233, %v229
    %v346 = vpack.c.b16 %v234, %v230
    %v347 = vpack.c.b16 %v235, %v231
    %v348 = vpack.c.b16 %v236, %v232
    %v349 = vpack.c.b16 %v241, %v237
    %v350 = vpack.c.b16 %v242, %v238
    %v351 = vpack.c.b16 %v243, %v239
    %v352 = vpack.c.b16 %v244, %v240
    %v353 = vpack.c.b16 %v249, %v245
    %v354 = vpack.c.b16 %v250, %v246
    %v355 = vpack.c.b16 %v251, %v247
    %v356 = vpack.c.b16 %v252, %v248
    %v357 = vpack.c.b16 %v257, %v253
    %v358 = vpack.c.b16 %v258, %v254
    %v359 = vpack.c.b16 %v259, %v255
    %v360 = vpack.c.b16 %v260, %v256
    %v361 = vpack.c.b16 %v265, %v261
    %v362 = vpack.c.b16 %v266, %v262
    %v363 = vpack.c.b16 %v267, %v263
    %v364 = vpack.c.b16 %v268, %v264
    %v365 = vpack.c.b16 %v273, %v269
    %v366 = vpack.c.b16 %v274, %v270
    %v367 = vpack.c.b16 %v275, %v271
    %v368 = vpack.c.b16 %v276, %v272
    %v369 = vpack.c.b16 %v281, %v277
    %v370 = vpack.c.b16 %v282, %v278
    %v371 = vpack.c.b16 %v283, %v279
    %v372 = vpack.c.b16 %v284, %v280
    %v373 = vpack.c.b16 %v289, %v285
    %v374 = vpack.c.b16 %v290, %v286
    %v375 = vpack.c.b16 %v291, %v287
    %v376 = vpack.c.b16 %v292, %v288
    %v377 = vpack.c.b16 %v297, %v293
    %v378 = vpack.c.b16 %v298, %v294
    %v379 = vpack.c.b16 %v299, %v295
    %v380 = vpack.c.b16 %v300, %v296
    %v381 = vpack.c.b16 %v305, %v301
    %v382 = vpack.c.b16 %v306, %v302
    %v383 = vpack.c.b16 %v307, %v303
    %v384 = vpack.c.b16 %v308, %v304
    %v385 = vpack.c.b16 %v313, %v309
    %v386 = vpack.c.b16 %v314, %v310
    %v387 = vpack.c.b16 %v315, %v311
    %v388 = vpack.c.b16 %v316, %v312
    %v389 = vpack.c.b16 %v321, %v317
    %v390 = vpack.c.b16 %v322, %v318
    %v391 = vpack.c.b16 %v323, %v319
    %v392 = vpack.c.b16 %v324, %v320
    %v393 = vpack.c.b16 %v329, %v325
    %v394 = vpack.c.b16 %v330, %v326
    %v395 = vpack.c.b16 %v331, %v327
    %v396 = vpack.c.b16 %v332, %v328
    %461 = vmatprep.subr.bf16.mxu0 %v362
    %462 = vmatpush1.bf16.msra.mxu0 %v361
    %463 = vmatprep.subr.bf16.mxu0 %v358
    %464 = vmatpush1.bf16.msra.mxu0 %v357
    %465 = vmatprep.subr.bf16.mxu0 %v354
    %466 = vmatpush1.bf16.msra.mxu0 %v353
    %467 = vmatprep.subr.bf16.mxu0 %v350
    %468 = vmatpush1.bf16.msra.mxu0 %v349
    %469 = vmatprep.subr.bf16.mxu0 %v346
    %470 = vmatpush1.bf16.msra.mxu0 %v345
    %471 = vmatprep.subr.bf16.mxu0 %v342
    %472 = vmatpush1.bf16.msra.mxu0 %v341
    %473 = vmatprep.subr.bf16.mxu0 %v338
    %474 = vmatpush1.bf16.msra.mxu0 %v337
    %475 = vmatprep.subr.bf16.mxu0 %v334
    %476 = vmatpush1.bf16.msra.mxu0 %v333
    %477 = vmatprep.subr.bf16.mxu0 %v394
    %478 = vmatpush2.bf16.msra.mxu0 %v393
    %479 = vmatprep.subr.bf16.mxu0 %v390
    %480 = vmatpush2.bf16.msra.mxu0 %v389
    %481 = vmatprep.subr.bf16.mxu0 %v386
    %482 = vmatpush2.bf16.msra.mxu0 %v385
    %483 = vmatprep.subr.bf16.mxu0 %v382
    %484 = vmatpush2.bf16.msra.mxu0 %v381
    %485 = vmatprep.subr.bf16.mxu0 %v378
    %486 = vmatpush2.bf16.msra.mxu0 %v377
    %487 = vmatprep.subr.bf16.mxu0 %v374
    %488 = vmatpush2.bf16.msra.mxu0 %v373
    %489 = vmatprep.subr.bf16.mxu0 %v370
    %490 = vmatpush2.bf16.msra.mxu0 %v369
    %491 = vmatprep.subr.bf16.mxu0 %v366
    %492 = vmatpush2.bf16.msra.mxu0 %v365
    %493 = vmatprep.mubr.bf16.mxu0 %v54
    %494 = vmatmul.mubr.bf16.gmra.mxu0 %v53
    %v495 = vpop.f32.mrf.mxu0
    %v496 = vadd.f32 %v124, %v495
    %v497 = vpop.f32.mrf.mxu0
    %v498 = vadd.f32 %v128, %v497
    %v499 = vpop.f32.mrf.mxu0
    %v500 = vpop.f32.mrf.mxu0
    %501 = vdwg.mxu0
    %502 = vmatprep.subr.bf16.mxu0 %v364
    %503 = vmatpush1.bf16.msra.mxu0 %v363
    %504 = vmatprep.subr.bf16.mxu0 %v360
    %505 = vmatpush1.bf16.msra.mxu0 %v359
    %506 = vmatprep.subr.bf16.mxu0 %v356
    %507 = vmatpush1.bf16.msra.mxu0 %v355
    %508 = vmatprep.subr.bf16.mxu0 %v352
    %509 = vmatpush1.bf16.msra.mxu0 %v351
    %510 = vmatprep.subr.bf16.mxu0 %v348
    %511 = vmatpush1.bf16.msra.mxu0 %v347
    %512 = vmatprep.subr.bf16.mxu0 %v344
    %513 = vmatpush1.bf16.msra.mxu0 %v343
    %514 = vmatprep.subr.bf16.mxu0 %v340
    %515 = vmatpush1.bf16.msra.mxu0 %v339
    %516 = vmatprep.subr.bf16.mxu0 %v336
    %517 = vmatpush1.bf16.msra.mxu0 %v335
    %518 = vmatprep.subr.bf16.mxu0 %v396
    %519 = vmatpush2.bf16.msra.mxu0 %v395
    %520 = vmatprep.subr.bf16.mxu0 %v392
    %521 = vmatpush2.bf16.msra.mxu0 %v391
    %522 = vmatprep.subr.bf16.mxu0 %v388
    %523 = vmatpush2.bf16.msra.mxu0 %v387
    %524 = vmatprep.subr.bf16.mxu0 %v384
    %525 = vmatpush2.bf16.msra.mxu0 %v383
    %526 = vmatprep.subr.bf16.mxu0 %v380
    %527 = vmatpush2.bf16.msra.mxu0 %v379
    %528 = vmatprep.subr.bf16.mxu0 %v376
    %529 = vmatpush2.bf16.msra.mxu0 %v375
    %530 = vmatprep.subr.bf16.mxu0 %v372
    %531 = vmatpush2.bf16.msra.mxu0 %v371
    %532 = vmatprep.subr.bf16.mxu0 %v368
    %533 = vmatpush2.bf16.msra.mxu0 %v367
    %534 = vmatprep.mubr.bf16.mxu0 %v54
    %535 = vmatmul.mubr.bf16.gmra.mxu0 %v53
    %v536 = vpop.f32.mrf.mxu0
    %v537 = vadd.f32 %v132, %v536
    %v538 = vpop.f32.mrf.mxu0
    %v539 = vadd.f32 %v136, %v538
    %v540 = vpop.f32.mrf.mxu0
    %v541 = vpop.f32.mrf.mxu0
    %542 = vdwg.mxu0
    %v543 = vxor.u32 %v496, 2147483648
    %v544 = vxor.u32 %v498, 2147483648
    %v545 = vmul.f32 %v543, 1.442695
    %v546 = vpow.pop %v545
    %v547 = vmul.f32 %v544, 1.442695
    %v548 = vpow.pop %v547
    %v549 = vadd.f32 %v546, 1.0
    %v550 = vadd.f32 %v548, 1.0
    %v551 = vrcp.pop %v549
    %v552 = vmul.f32 1.0, %v551
    %v553 = vrcp.pop %v550
    %v554 = vmul.f32 1.0, %v553
    %v555 = vmul.f32 %v552, %v539
    %v556 = vadd.f32 %v537, %v555
    %v557 = vtanh.pop %v556
    %v558 = vsub.f32 %v52, %v557
    %v559 = vmul.f32 %v554, %v558
    %v560 = vadd.f32 %v557, %v559
    %561 = vst [vmem:[%s6] sm:$0x3] %v560
    %s562 = scalar_lea.vmem %s1, 2
    %v563 = vld [vmem:[%s562] sm:$0x3]
    %v564 = vpack.c.bf16 %v560, %v560
    %v565 = vpack.c.bf16 %v563, %v563
    %v566 = vld [vmem:[#allocation4] sm:$0xff]
    %v567 = vld [vmem:[#allocation4 + $0x8] sm:$0xff]
    %v568 = vld [vmem:[#allocation4 + $0x10] sm:$0xff]
    %v569 = vld [vmem:[#allocation4 + $0x18] sm:$0xff]
    %v570 = vld [vmem:[#allocation4 + $0x20] sm:$0xff]
    %v571 = vld [vmem:[#allocation4 + $0x28] sm:$0xff]
    %v572 = vld [vmem:[#allocation4 + $0x30] sm:$0xff]
    %v573 = vld [vmem:[#allocation4 + $0x38] sm:$0xff]
    %v574 = vld [vmem:[#allocation4 + $0x40] sm:$0xff]
    %v575 = vld [vmem:[#allocation4 + $0x48] sm:$0xff]
    %v576 = vld [vmem:[#allocation4 + $0x50] sm:$0xff]
    %v577 = vld [vmem:[#allocation4 + $0x58] sm:$0xff]
    %v578 = vld [vmem:[#allocation4 + $0x60] sm:$0xff]
    %v579 = vld [vmem:[#allocation4 + $0x68] sm:$0xff]
    %v580 = vld [vmem:[#allocation4 + $0x70] sm:$0xff]
    %v581 = vld [vmem:[#allocation4 + $0x78] sm:$0xff]
    %v582 = vld [vmem:[#allocation4 + $0x80] sm:$0xff]
    %v583 = vld [vmem:[#allocation4 + $0x88] sm:$0xff]
    %v584 = vld [vmem:[#allocation4 + $0x90] sm:$0xff]
    %v585 = vld [vmem:[#allocation4 + $0x98] sm:$0xff]
    %v586 = vld [vmem:[#allocation4 + $0xa0] sm:$0xff]
    %v587 = vld [vmem:[#allocation4 + $0xa8] sm:$0xff]
    %v588 = vld [vmem:[#allocation4 + $0xb0] sm:$0xff]
    %v589 = vld [vmem:[#allocation4 + $0xb8] sm:$0xff]
    %v590 = vld [vmem:[#allocation4 + $0xc0] sm:$0xff]
    %v591 = vld [vmem:[#allocation4 + $0xc8] sm:$0xff]
    %v592 = vld [vmem:[#allocation4 + $0xd0] sm:$0xff]
    %v593 = vld [vmem:[#allocation4 + $0xd8] sm:$0xff]
    %v594 = vld [vmem:[#allocation4 + $0xe0] sm:$0xff]
    %v595 = vld [vmem:[#allocation4 + $0xe8] sm:$0xff]
    %v596 = vld [vmem:[#allocation4 + $0xf0] sm:$0xff]
    %v597 = vld [vmem:[#allocation4 + $0xf8] sm:$0xff]
    %v598 = vld [vmem:[#allocation4 + $0x100] sm:$0xff]
    %v599 = vld [vmem:[#allocation4 + $0x108] sm:$0xff]
    %v600 = vld [vmem:[#allocation4 + $0x110] sm:$0xff]
    %v601 = vld [vmem:[#allocation4 + $0x118] sm:$0xff]
    %v602 = vld [vmem:[#allocation4 + $0x120] sm:$0xff]
    %v603 = vld [vmem:[#allocation4 + $0x128] sm:$0xff]
    %v604 = vld [vmem:[#allocation4 + $0x130] sm:$0xff]
    %v605 = vld [vmem:[#allocation4 + $0x138] sm:$0xff]
    %v606 = vld [vmem:[#allocation4 + $0x140] sm:$0xff]
    %v607 = vld [vmem:[#allocation4 + $0x148] sm:$0xff]
    %v608 = vld [vmem:[#allocation4 + $0x150] sm:$0xff]
    %v609 = vld [vmem:[#allocation4 + $0x158] sm:$0xff]
    %v610 = vld [vmem:[#allocation4 + $0x160] sm:$0xff]
    %v611 = vld [vmem:[#allocation4 + $0x168] sm:$0xff]
    %v612 = vld [vmem:[#allocation4 + $0x170] sm:$0xff]
    %v613 = vld [vmem:[#allocation4 + $0x178] sm:$0xff]
    %v614 = vld [vmem:[#allocation4 + $0x180] sm:$0xff]
    %v615 = vld [vmem:[#allocation4 + $0x188] sm:$0xff]
    %v616 = vld [vmem:[#allocation4 + $0x190] sm:$0xff]
    %v617 = vld [vmem:[#allocation4 + $0x198] sm:$0xff]
    %v618 = vld [vmem:[#allocation4 + $0x1a0] sm:$0xff]
    %v619 = vld [vmem:[#allocation4 + $0x1a8] sm:$0xff]
    %v620 = vld [vmem:[#allocation4 + $0x1b0] sm:$0xff]
    %v621 = vld [vmem:[#allocation4 + $0x1b8] sm:$0xff]
    %v622 = vld [vmem:[#allocation4 + $0x1c0] sm:$0xff]
    %v623 = vld [vmem:[#allocation4 + $0x1c8] sm:$0xff]
    %v624 = vld [vmem:[#allocation4 + $0x1d0] sm:$0xff]
    %v625 = vld [vmem:[#allocation4 + $0x1d8] sm:$0xff]
    %v626 = vld [vmem:[#allocation4 + $0x1e0] sm:$0xff]
    %v627 = vld [vmem:[#allocation4 + $0x1e8] sm:$0xff]
    %v628 = vld [vmem:[#allocation4 + $0x1f0] sm:$0xff]
    %v629 = vld [vmem:[#allocation4 + $0x1f8] sm:$0xff]
    %v630 = vld [vmem:[%s5] sm:$0xf]
    %v632 = vlaneseq
    %v633 = vshrl.u32 %v632, 7
    %v634 = vsub.s32 0, %v633
    %v635 = vrot.slane %v630, %v634
    %v636 = vlaneseq
    %v637 = vshrl.u32 %v636, 7
    %v638 = vsub.s32 1, %v637
    %v639 = vrot.slane %v630, %v638
    %v640 = vlaneseq
    %v641 = vshrl.u32 %v640, 7
    %v642 = vsub.s32 2, %v641
    %v643 = vrot.slane %v630, %v642
    %v644 = vlaneseq
    %v645 = vshrl.u32 %v644, 7
    %v646 = vsub.s32 3, %v645
    %v647 = vrot.slane %v630, %v646
    %v716 = vunpack.c.l.b16 %v566
    %v717 = vunpack.c.h.b16 %v566
    %v718 = vunpack.c.l.b16 %v567
    %v719 = vunpack.c.h.b16 %v567
    %v720 = vunpack.c.l.b16 %v568
    %v721 = vunpack.c.h.b16 %v568
    %v722 = vunpack.c.l.b16 %v569
    %v723 = vunpack.c.h.b16 %v569
    %v724 = vunpack.c.l.b16 %v570
    %v725 = vunpack.c.h.b16 %v570
    %v726 = vunpack.c.l.b16 %v571
    %v727 = vunpack.c.h.b16 %v571
    %v728 = vunpack.c.l.b16 %v572
    %v729 = vunpack.c.h.b16 %v572
    %v730 = vunpack.c.l.b16 %v573
    %v731 = vunpack.c.h.b16 %v573
    %v732 = vunpack.c.l.b16 %v574
    %v733 = vunpack.c.h.b16 %v574
    %v734 = vunpack.c.l.b16 %v575
    %v735 = vunpack.c.h.b16 %v575
    %v736 = vunpack.c.l.b16 %v576
    %v737 = vunpack.c.h.b16 %v576
    %v738 = vunpack.c.l.b16 %v577
    %v739 = vunpack.c.h.b16 %v577
    %v740 = vunpack.c.l.b16 %v578
    %v741 = vunpack.c.h.b16 %v578
    %v742 = vunpack.c.l.b16 %v579
    %v743 = vunpack.c.h.b16 %v579
    %v744 = vunpack.c.l.b16 %v580
    %v745 = vunpack.c.h.b16 %v580
    %v746 = vunpack.c.l.b16 %v581
    %v747 = vunpack.c.h.b16 %v581
    %v748 = vunpack.c.l.b16 %v582
    %v749 = vunpack.c.h.b16 %v582
    %v750 = vunpack.c.l.b16 %v583
    %v751 = vunpack.c.h.b16 %v583
    %v752 = vunpack.c.l.b16 %v584
    %v753 = vunpack.c.h.b16 %v584
    %v754 = vunpack.c.l.b16 %v585
    %v755 = vunpack.c.h.b16 %v585
    %v756 = vunpack.c.l.b16 %v586
    %v757 = vunpack.c.h.b16 %v586
    %v758 = vunpack.c.l.b16 %v587
    %v759 = vunpack.c.h.b16 %v587
    %v760 = vunpack.c.l.b16 %v588
    %v761 = vunpack.c.h.b16 %v588
    %v762 = vunpack.c.l.b16 %v589
    %v763 = vunpack.c.h.b16 %v589
    %v764 = vunpack.c.l.b16 %v590
    %v765 = vunpack.c.h.b16 %v590
    %v766 = vunpack.c.l.b16 %v591
    %v767 = vunpack.c.h.b16 %v591
    %v768 = vunpack.c.l.b16 %v592
    %v769 = vunpack.c.h.b16 %v592
    %v770 = vunpack.c.l.b16 %v593
    %v771 = vunpack.c.h.b16 %v593
    %v772 = vunpack.c.l.b16 %v594
    %v773 = vunpack.c.h.b16 %v594
    %v774 = vunpack.c.l.b16 %v595
    %v775 = vunpack.c.h.b16 %v595
    %v776 = vunpack.c.l.b16 %v596
    %v777 = vunpack.c.h.b16 %v596
    %v778 = vunpack.c.l.b16 %v597
    %v779 = vunpack.c.h.b16 %v597
    %v780 = vunpack.c.l.b16 %v598
    %v781 = vunpack.c.h.b16 %v598
    %v782 = vunpack.c.l.b16 %v599
    %v783 = vunpack.c.h.b16 %v599
    %v784 = vunpack.c.l.b16 %v600
    %v785 = vunpack.c.h.b16 %v600
    %v786 = vunpack.c.l.b16 %v601
    %v787 = vunpack.c.h.b16 %v601
    %v788 = vunpack.c.l.b16 %v602
    %v789 = vunpack.c.h.b16 %v602
    %v790 = vunpack.c.l.b16 %v603
    %v791 = vunpack.c.h.b16 %v603
    %v792 = vunpack.c.l.b16 %v604
    %v793 = vunpack.c.h.b16 %v604
    %v794 = vunpack.c.l.b16 %v605
    %v795 = vunpack.c.h.b16 %v605
    %v796 = vunpack.c.l.b16 %v606
    %v797 = vunpack.c.h.b16 %v606
    %v798 = vunpack.c.l.b16 %v607
    %v799 = vunpack.c.h.b16 %v607
    %v800 = vunpack.c.l.b16 %v608
    %v801 = vunpack.c.h.b16 %v608
    %v802 = vunpack.c.l.b16 %v609
    %v803 = vunpack.c.h.b16 %v609
    %v804 = vunpack.c.l.b16 %v610
    %v805 = vunpack.c.h.b16 %v610
    %v806 = vunpack.c.l.b16 %v611
    %v807 = vunpack.c.h.b16 %v611
    %v808 = vunpack.c.l.b16 %v612
    %v809 = vunpack.c.h.b16 %v612
    %v810 = vunpack.c.l.b16 %v613
    %v811 = vunpack.c.h.b16 %v613
    %v812 = vunpack.c.l.b16 %v614
    %v813 = vunpack.c.h.b16 %v614
    %v814 = vunpack.c.l.b16 %v615
    %v815 = vunpack.c.h.b16 %v615
    %v816 = vunpack.c.l.b16 %v616
    %v817 = vunpack.c.h.b16 %v616
    %v818 = vunpack.c.l.b16 %v617
    %v819 = vunpack.c.h.b16 %v617
    %v820 = vunpack.c.l.b16 %v618
    %v821 = vunpack.c.h.b16 %v618
    %v822 = vunpack.c.l.b16 %v619
    %v823 = vunpack.c.h.b16 %v619
    %v824 = vunpack.c.l.b16 %v620
    %v825 = vunpack.c.h.b16 %v620
    %v826 = vunpack.c.l.b16 %v621
    %v827 = vunpack.c.h.b16 %v621
    %v828 = vunpack.c.l.b16 %v622
    %v829 = vunpack.c.h.b16 %v622
    %v830 = vunpack.c.l.b16 %v623
    %v831 = vunpack.c.h.b16 %v623
    %v832 = vunpack.c.l.b16 %v624
    %v833 = vunpack.c.h.b16 %v624
    %v834 = vunpack.c.l.b16 %v625
    %v835 = vunpack.c.h.b16 %v625
    %v836 = vunpack.c.l.b16 %v626
    %v837 = vunpack.c.h.b16 %v626
    %v838 = vunpack.c.l.b16 %v627
    %v839 = vunpack.c.h.b16 %v627
    %v840 = vunpack.c.l.b16 %v628
    %v841 = vunpack.c.h.b16 %v628
    %v842 = vunpack.c.l.b16 %v629
    %v843 = vunpack.c.h.b16 %v629
    %v844 = vpack.c.b16 %v720, %v716
    %v845 = vpack.c.b16 %v721, %v717
    %v846 = vpack.c.b16 %v722, %v718
    %v847 = vpack.c.b16 %v723, %v719
    %v848 = vpack.c.b16 %v728, %v724
    %v849 = vpack.c.b16 %v729, %v725
    %v850 = vpack.c.b16 %v730, %v726
    %v851 = vpack.c.b16 %v731, %v727
    %v852 = vpack.c.b16 %v736, %v732
    %v853 = vpack.c.b16 %v737, %v733
    %v854 = vpack.c.b16 %v738, %v734
    %v855 = vpack.c.b16 %v739, %v735
    %v856 = vpack.c.b16 %v744, %v740
    %v857 = vpack.c.b16 %v745, %v741
    %v858 = vpack.c.b16 %v746, %v742
    %v859 = vpack.c.b16 %v747, %v743
    %v860 = vpack.c.b16 %v752, %v748
    %v861 = vpack.c.b16 %v753, %v749
    %v862 = vpack.c.b16 %v754, %v750
    %v863 = vpack.c.b16 %v755, %v751
    %v864 = vpack.c.b16 %v760, %v756
    %v865 = vpack.c.b16 %v761, %v757
    %v866 = vpack.c.b16 %v762, %v758
    %v867 = vpack.c.b16 %v763, %v759
    %v868 = vpack.c.b16 %v768, %v764
    %v869 = vpack.c.b16 %v769, %v765
    %v870 = vpack.c.b16 %v770, %v766
    %v871 = vpack.c.b16 %v771, %v767
    %v872 = vpack.c.b16 %v776, %v772
    %v873 = vpack.c.b16 %v777, %v773
    %v874 = vpack.c.b16 %v778, %v774
    %v875 = vpack.c.b16 %v779, %v775
    %v876 = vpack.c.b16 %v784, %v780
    %v877 = vpack.c.b16 %v785, %v781
    %v878 = vpack.c.b16 %v786, %v782
    %v879 = vpack.c.b16 %v787, %v783
    %v880 = vpack.c.b16 %v792, %v788
    %v881 = vpack.c.b16 %v793, %v789
    %v882 = vpack.c.b16 %v794, %v790
    %v883 = vpack.c.b16 %v795, %v791
    %v884 = vpack.c.b16 %v800, %v796
    %v885 = vpack.c.b16 %v801, %v797
    %v886 = vpack.c.b16 %v802, %v798
    %v887 = vpack.c.b16 %v803, %v799
    %v888 = vpack.c.b16 %v808, %v804
    %v889 = vpack.c.b16 %v809, %v805
    %v890 = vpack.c.b16 %v810, %v806
    %v891 = vpack.c.b16 %v811, %v807
    %v892 = vpack.c.b16 %v816, %v812
    %v893 = vpack.c.b16 %v817, %v813
    %v894 = vpack.c.b16 %v818, %v814
    %v895 = vpack.c.b16 %v819, %v815
    %v896 = vpack.c.b16 %v824, %v820
    %v897 = vpack.c.b16 %v825, %v821
    %v898 = vpack.c.b16 %v826, %v822
    %v899 = vpack.c.b16 %v827, %v823
    %v900 = vpack.c.b16 %v832, %v828
    %v901 = vpack.c.b16 %v833, %v829
    %v902 = vpack.c.b16 %v834, %v830
    %v903 = vpack.c.b16 %v835, %v831
    %v904 = vpack.c.b16 %v840, %v836
    %v905 = vpack.c.b16 %v841, %v837
    %v906 = vpack.c.b16 %v842, %v838
    %v907 = vpack.c.b16 %v843, %v839
    %972 = vmatprep.subr.bf16.mxu0 %v873
    %973 = vmatpush1.bf16.msra.mxu0 %v872
    %974 = vmatprep.subr.bf16.mxu0 %v869
    %975 = vmatpush1.bf16.msra.mxu0 %v868
    %976 = vmatprep.subr.bf16.mxu0 %v865
    %977 = vmatpush1.bf16.msra.mxu0 %v864
    %978 = vmatprep.subr.bf16.mxu0 %v861
    %979 = vmatpush1.bf16.msra.mxu0 %v860
    %980 = vmatprep.subr.bf16.mxu0 %v857
    %981 = vmatpush1.bf16.msra.mxu0 %v856
    %982 = vmatprep.subr.bf16.mxu0 %v853
    %983 = vmatpush1.bf16.msra.mxu0 %v852
    %984 = vmatprep.subr.bf16.mxu0 %v849
    %985 = vmatpush1.bf16.msra.mxu0 %v848
    %986 = vmatprep.subr.bf16.mxu0 %v845
    %987 = vmatpush1.bf16.msra.mxu0 %v844
    %988 = vmatprep.subr.bf16.mxu0 %v905
    %989 = vmatpush2.bf16.msra.mxu0 %v904
    %990 = vmatprep.subr.bf16.mxu0 %v901
    %991 = vmatpush2.bf16.msra.mxu0 %v900
    %992 = vmatprep.subr.bf16.mxu0 %v897
    %993 = vmatpush2.bf16.msra.mxu0 %v896
    %994 = vmatprep.subr.bf16.mxu0 %v893
    %995 = vmatpush2.bf16.msra.mxu0 %v892
    %996 = vmatprep.subr.bf16.mxu0 %v889
    %997 = vmatpush2.bf16.msra.mxu0 %v888
    %998 = vmatprep.subr.bf16.mxu0 %v885
    %999 = vmatpush2.bf16.msra.mxu0 %v884
    %1000 = vmatprep.subr.bf16.mxu0 %v881
    %1001 = vmatpush2.bf16.msra.mxu0 %v880
    %1002 = vmatprep.subr.bf16.mxu0 %v877
    %1003 = vmatpush2.bf16.msra.mxu0 %v876
    %1004 = vmatprep.mubr.bf16.mxu0 %v565
    %1005 = vmatmul.mubr.bf16.gmra.mxu0 %v564
    %v1006 = vpop.f32.mrf.mxu0
    %v1007 = vadd.f32 %v635, %v1006
    %v1008 = vpop.f32.mrf.mxu0
    %v1009 = vadd.f32 %v639, %v1008
    %v1010 = vpop.f32.mrf.mxu0
    %v1011 = vpop.f32.mrf.mxu0
    %1012 = vdwg.mxu0
    %1013 = vmatprep.subr.bf16.mxu0 %v875
    %1014 = vmatpush1.bf16.msra.mxu0 %v874
    %1015 = vmatprep.subr.bf16.mxu0 %v871
    %1016 = vmatpush1.bf16.msra.mxu0 %v870
    %1017 = vmatprep.subr.bf16.mxu0 %v867
    %1018 = vmatpush1.bf16.msra.mxu0 %v866
    %1019 = vmatprep.subr.bf16.mxu0 %v863
    %1020 = vmatpush1.bf16.msra.mxu0 %v862
    %1021 = vmatprep.subr.bf16.mxu0 %v859
    %1022 = vmatpush1.bf16.msra.mxu0 %v858
    %1023 = vmatprep.subr.bf16.mxu0 %v855
    %1024 = vmatpush1.bf16.msra.mxu0 %v854
    %1025 = vmatprep.subr.bf16.mxu0 %v851
    %1026 = vmatpush1.bf16.msra.mxu0 %v850
    %1027 = vmatprep.subr.bf16.mxu0 %v847
    %1028 = vmatpush1.bf16.msra.mxu0 %v846
    %1029 = vmatprep.subr.bf16.mxu0 %v907
    %1030 = vmatpush2.bf16.msra.mxu0 %v906
    %1031 = vmatprep.subr.bf16.mxu0 %v903
    %1032 = vmatpush2.bf16.msra.mxu0 %v902
    %1033 = vmatprep.subr.bf16.mxu0 %v899
    %1034 = vmatpush2.bf16.msra.mxu0 %v898
    %1035 = vmatprep.subr.bf16.mxu0 %v895
    %1036 = vmatpush2.bf16.msra.mxu0 %v894
    %1037 = vmatprep.subr.bf16.mxu0 %v891
    %1038 = vmatpush2.bf16.msra.mxu0 %v890
    %1039 = vmatprep.subr.bf16.mxu0 %v887
    %1040 = vmatpush2.bf16.msra.mxu0 %v886
    %1041 = vmatprep.subr.bf16.mxu0 %v883
    %1042 = vmatpush2.bf16.msra.mxu0 %v882
    %1043 = vmatprep.subr.bf16.mxu0 %v879
    %1044 = vmatpush2.bf16.msra.mxu0 %v878
    %1045 = vmatprep.mubr.bf16.mxu0 %v565
    %1046 = vmatmul.mubr.bf16.gmra.mxu0 %v564
    %v1047 = vpop.f32.mrf.mxu0
    %v1048 = vadd.f32 %v643, %v1047
    %v1049 = vpop.f32.mrf.mxu0
    %v1050 = vadd.f32 %v647, %v1049
    %v1051 = vpop.f32.mrf.mxu0
    %v1052 = vpop.f32.mrf.mxu0
    %1053 = vdwg.mxu0
    %v1054 = vxor.u32 %v1007, 2147483648
    %v1055 = vxor.u32 %v1009, 2147483648
    %v1056 = vmul.f32 %v1054, 1.442695
    %v1057 = vpow.pop %v1056
    %v1058 = vmul.f32 %v1055, 1.442695
    %v1059 = vpow.pop %v1058
    %v1060 = vadd.f32 %v1057, 1.0
    %v1061 = vadd.f32 %v1059, 1.0
    %v1062 = vrcp.pop %v1060
    %v1063 = vmul.f32 1.0, %v1062
    %v1064 = vrcp.pop %v1061
    %v1065 = vmul.f32 1.0, %v1064
    %v1066 = vmul.f32 %v1063, %v1050
    %v1067 = vadd.f32 %v1048, %v1066
    %v1068 = vtanh.pop %v1067
    %v1069 = vsub.f32 %v563, %v1068
    %v1070 = vmul.f32 %v1065, %v1069
    %v1071 = vadd.f32 %v1068, %v1070
    %s1072 = scalar_lea.vmem %s6, 2
    %1073 = vst [vmem:[%s1072] sm:$0x3] %v1071
    // Predicated region
    $region34: #{forward.1} parent=1 // pred_check
      _
    $region35: #{forward.1} parent=1 // pred_check_branch
      %1075 = sbr.rel (0) target = $region37
    $region36: #{forward.1} parent=1 // pred_region
      _
    $region37: #{forward.1} parent=1 // pred_fallthru
      _
    // Predicated region
    $region38: #{forward.1} parent=1 // pred_check
      _
    $region39: #{forward.1} parent=1 // pred_check_branch
      %1077 = sbr.rel (0) target = $region41
    $region40: #{forward.1} parent=1 // pred_region
      _
    $region41: #{forward.1} parent=1 // pred_fallthru
      _
    %1078 = vsyncpa [#allocation3], 1
    %1079 = vsyncpa [#allocation5], 1

</llo_original>
